<compile_context>
chip_gen: v6e
topology: v6e:2x2x1
jax: 0.10.0
libtpu: 0.0.40
codegen_flags: <defaults>
</compile_context>

<pallas_src>
import jax
import jax.numpy as jnp
from jax.experimental import pallas as pl
from jax.experimental.pallas import tpu as pltpu


def _custom_loss_kernel(ids_ref,      # VMEM [TB, S]     int32
                        maskn_ref,    # VMEM [TB, S]     f32   mask / sum(mask)
                        table_ref,    # VMEM [V, H]      f32
                        w_ref,        # VMEM [H, L_pad]  f32
                        b_ref,        # VMEM [1, L_pad]  f32
                        labels_ref,   # VMEM [TB, L_pad] f32
                        posw_ref,     # VMEM [1, L_pad]  f32
                        lw_ref,       # VMEM [TB, L_pad] f32   validity weights
                        logits_ref,   # VMEM out [TB, L_pad]
                        loss_ref):    # VMEM out [1, L_pad]    per-tile loss partials
    TB, S = ids_ref.shape
    V = table_ref.shape[0]

    ids = ids_ref[...]                                   # [TB, S] int32
    maskn = maskn_ref[...]                               # [TB, S] f32

    # ---- fused gather + masked mean pool as one MXU matmul ------------------
    # oh_w[b, v] = sum_s maskn[b, s] * (ids[b, s] == v)   (mask-weighted one-hot)
    vocab_iota = jax.lax.broadcasted_iota(jnp.int32, (TB, S, V), 2)
    onehot = (ids[:, :, None] == vocab_iota).astype(jnp.float32)     # [TB, S, V]
    oh_w = jnp.sum(onehot * maskn[:, :, None], axis=1)               # [TB, V]

    pooled = jnp.dot(oh_w, table_ref[...],
                     preferred_element_type=jnp.float32)             # [TB, H]

    # ---- classifier head (MXU) ----------------------------------------------
    logits = jnp.dot(pooled, w_ref[...],
                     preferred_element_type=jnp.float32) + b_ref[...]  # [TB, L_pad]
    logits_ref[...] = logits

    # ---- BCEWithLogitsLoss(pos_weight), numerically-stable PyTorch form ------
    y = labels_ref[...]                                  # [TB, L_pad]
    pw = posw_ref[...]                                   # [1, L_pad] broadcasts
    log_weight = 1.0 + (pw - 1.0) * y
    neg_abs = -jnp.abs(logits)
    loss_elem = (1.0 - y) * logits + log_weight * (
        jnp.log1p(jnp.exp(neg_abs)) + jnp.maximum(-logits, 0.0))

    # Zero padded rows / padded label columns, reduce over the batch tile
    # (XLU sublane reduce is free), emit one lane-dense [1, L_pad] partial.
    loss_ref[...] = jnp.sum(loss_elem * lw_ref[...], axis=0, keepdims=True)


def custom_loss_model(input_ids, attention_mask, labels, params, *, block_b=128):
    """Forward pass of CustomLossModel. Returns (loss, logits)."""
    emb_table = params["emb_table"].astype(jnp.float32)    # [V, H]
    w = params["classifier_w"].astype(jnp.float32)         # [H, L]
    b = params["classifier_b"].astype(jnp.float32)         # [1, L]
    pos_weight = params["pos_weight"].astype(jnp.float32)  # [1, L]

    B, S = input_ids.shape
    V, H = emb_table.shape
    L = w.shape[1]
    L_pad = ((L + 127) // 128) * 128                        # lane-dense head width

    # Batch tile: default 128 (fills MXU M dim), clamped for tiny batches.
    TB = max(8, min(block_b, ((B + 7) // 8) * 8))
    TB = ((TB + 7) // 8) * 8
    B_pad = ((B + TB - 1) // TB) * TB
    n_tiles = B_pad // TB

    # ---- wrapper-side layout plumbing (cheap XLA work) -----------------------
    ids_p = jnp.pad(input_ids.astype(jnp.int32), ((0, B_pad - B), (0, 0)))
    # Padded rows get an all-ones mask so their denominator is finite; real
    # all-zero-mask rows still produce NaN, matching PyTorch.
    mask_p = jnp.pad(attention_mask.astype(jnp.float32),
                     ((0, B_pad - B), (0, 0)), constant_values=1.0)
    denom = jnp.sum(mask_p, axis=1, keepdims=True)          # [B_pad, 1]
    maskn = mask_p / denom                                   # [B_pad, S] lane-dense

    labels_p = jnp.pad(labels.astype(jnp.float32),
                       ((0, B_pad - B), (0, L_pad - L)))
    w_pad = jnp.pad(w, ((0, 0), (0, L_pad - L)))
    b_pad = jnp.pad(b, ((0, 0), (0, L_pad - L)))
    posw_pad = jnp.pad(pos_weight, ((0, 0), (0, L_pad - L)), constant_values=1.0)

    col_valid = (jnp.arange(L_pad) < L).astype(jnp.float32)[None, :]
    row_valid = (jnp.arange(B_pad) < B).astype(jnp.float32)[:, None]
    loss_w = row_valid * col_valid                           # [B_pad, L_pad]

    grid_spec = pltpu.PrefetchScalarGridSpec(
        num_scalar_prefetch=0,
        grid=(n_tiles,),
        in_specs=[
            pl.BlockSpec((TB, S), lambda t: (t, 0)),         # input ids
            pl.BlockSpec((TB, S), lambda t: (t, 0)),         # normalized mask
            pl.BlockSpec((V, H), lambda t: (0, 0)),          # emb table (VMEM resident)
            pl.BlockSpec((H, L_pad), lambda t: (0, 0)),      # W
            pl.BlockSpec((1, L_pad), lambda t: (0, 0)),      # b
            pl.BlockSpec((TB, L_pad), lambda t: (t, 0)),     # labels
            pl.BlockSpec((1, L_pad), lambda t: (0, 0)),      # pos_weight
            pl.BlockSpec((TB, L_pad), lambda t: (t, 0)),     # loss validity weights
        ],
        out_specs=(
            pl.BlockSpec((TB, L_pad), lambda t: (t, 0)),     # logits (padded)
            pl.BlockSpec((1, L_pad), lambda t: (t, 0)),      # per-tile loss partials
        ),
    )

    logits_pad, loss_partials = pl.pallas_call(
        _custom_loss_kernel,
        grid_spec=grid_spec,
        out_shape=(
            jax.ShapeDtypeStruct((B_pad, L_pad), jnp.float32),
            jax.ShapeDtypeStruct((n_tiles, L_pad), jnp.float32),
        ),
        compiler_params=pltpu.CompilerParams(
            dimension_semantics=("parallel",)),
    )(ids_p, maskn, emb_table, w_pad, b_pad, labels_p, posw_pad, loss_w)

    logits = logits_pad[:B, :L]
    loss = jnp.sum(loss_partials) / (B * L)   # padded rows/cols contribute 0
    return loss, logits


def _reference(input_ids, attention_mask, labels, params):
    """Pure-JAX reference (mirrors the PyTorch semantics)."""
    emb = jnp.take(params["emb_table"], input_ids, axis=0)
    mask = attention_mask.astype(jnp.float32)
    pooled = jnp.sum(emb * mask[:, :, None], axis=1) / jnp.sum(
        mask, axis=1, keepdims=True)
    logits = pooled @ params["classifier_w"] + params["classifier_b"]
    y = labels.astype(jnp.float32)
    pw = params["pos_weight"]
    log_weight = 1.0 + (pw - 1.0) * y
    loss_elem = (1.0 - y) * logits + log_weight * (
        jnp.log1p(jnp.exp(-jnp.abs(logits))) + jnp.maximum(-logits, 0.0))
    return jnp.mean(loss_elem), logits


if __name__ == "__main__":
    # Small shapes: batch=2, seq=8, hidden=32, vocab=64, num_labels=8.
    B, S, H, V, L = 2, 8, 32, 64, 8

    key = jax.random.PRNGKey(0)
    k_emb, k_w, k_b, k_ids, k_lab, k_pw = jax.random.split(key, 6)

    params = {
        "emb_table": jax.random.normal(k_emb, (V, H), jnp.float32) * 0.1,
        "classifier_w": jax.random.normal(k_w, (H, L), jnp.float32) * 0.1,
        "classifier_b": jax.random.normal(k_b, (1, L), jnp.float32) * 0.01,
        "pos_weight": jnp.abs(jax.random.normal(k_pw, (1, L), jnp.float32)) + 1.0,
    }

    input_ids = jax.random.randint(k_ids, (B, S), 0, V, dtype=jnp.int32)
    attention_mask = jnp.ones((B, S), dtype=jnp.float32).at[:, S - 2:].set(0.0)
    labels = jax.random.bernoulli(k_lab, 0.5, (B, L)).astype(jnp.float32)

    loss, logits = custom_loss_model(input_ids, attention_mask, labels, params)
    loss = jax.block_until_ready(loss)
    logits = jax.block_until_ready(logits)

    ref_loss, ref_logits = _reference(input_ids, attention_mask, labels, params)

    assert jnp.allclose(logits, ref_logits, atol=1e-5, rtol=1e-5), "logits mismatch"
    assert jnp.allclose(loss, ref_loss, atol=1e-5, rtol=1e-5), "loss mismatch"

    print("KERNEL_OK")
</pallas_src>

<mosaic_0001>
module attributes {stable_mosaic.version = 11 : i64} {
  func.func @_custom_loss_kernel(%arg0: i32, %arg1: memref<8x8xi32, #tpu.memory_space<vmem>>, %arg2: memref<8x8xf32, #tpu.memory_space<vmem>>, %arg3: memref<64x32xf32, #tpu.memory_space<vmem>>, %arg4: memref<32x128xf32, #tpu.memory_space<vmem>>, %arg5: memref<1x128xf32, #tpu.memory_space<vmem>>, %arg6: memref<8x128xf32, #tpu.memory_space<vmem>>, %arg7: memref<1x128xf32, #tpu.memory_space<vmem>>, %arg8: memref<8x128xf32, #tpu.memory_space<vmem>>, %arg9: memref<8x128xf32, #tpu.memory_space<vmem>>, %arg10: memref<1x128xf32, #tpu.memory_space<vmem>>) attributes {dimension_semantics = [#tpu.dimension_semantics<parallel>], iteration_bounds = array<i64: 1>, scalar_prefetch = 0 : i64, scratch_operands = 0 : i64, tpu.core_type = #tpu.core_type<tc>, window_params = [{transform_indices = @transform_0, window_bounds = array<i64: 8, 8>}, {transform_indices = @transform_1, window_bounds = array<i64: 8, 8>}, {pipeline_mode = #tpu.pipeline_mode<synchronous>, transform_indices = @transform_2, window_bounds = array<i64: 64, 32>}, {pipeline_mode = #tpu.pipeline_mode<synchronous>, transform_indices = @transform_3, window_bounds = array<i64: 32, 128>}, {pipeline_mode = #tpu.pipeline_mode<synchronous>, transform_indices = @transform_4, window_bounds = array<i64: 1, 128>}, {transform_indices = @transform_5, window_bounds = array<i64: 8, 128>}, {pipeline_mode = #tpu.pipeline_mode<synchronous>, transform_indices = @transform_6, window_bounds = array<i64: 1, 128>}, {transform_indices = @transform_7, window_bounds = array<i64: 8, 128>}, {transform_indices = @transform_8, window_bounds = array<i64: 8, 128>}, {transform_indices = @transform_9, window_bounds = array<i64: 1, 128>}]} {
    %c0 = arith.constant 0 : index
    %c0_0 = arith.constant 0 : index
    %0 = vector.load %arg1[%c0, %c0_0] : memref<8x8xi32, #tpu.memory_space<vmem>>, vector<8x8xi32>
    %c0_1 = arith.constant 0 : index
    %c0_2 = arith.constant 0 : index
    %1 = vector.load %arg2[%c0_1, %c0_2] : memref<8x8xf32, #tpu.memory_space<vmem>>, vector<8x8xf32>
    %2 = tpu.iota {dimensions = array<i32: 2>} : vector<8x8x64xi32>
    %3 = vector.shape_cast %0 : vector<8x8xi32> to vector<8x8x1xi32>
    %4 = vector.broadcast %3 : vector<8x8x1xi32> to vector<8x8x64xi32>
    %5 = arith.cmpi eq, %4, %2 : vector<8x8x64xi32>
    %6 = arith.extui %5 : vector<8x8x64xi1> to vector<8x8x64xi32>
    %7 = arith.sitofp %6 : vector<8x8x64xi32> to vector<8x8x64xf32>
    %8 = vector.shape_cast %1 : vector<8x8xf32> to vector<8x8x1xf32>
    %9 = vector.broadcast %8 : vector<8x8x1xf32> to vector<8x8x64xf32>
    %10 = arith.mulf %7, %9 : vector<8x8x64xf32>
    %cst = arith.constant dense<0.000000e+00> : vector<8x64xf32>
    %11 = vector.multi_reduction <add>, %10, %cst [1] : vector<8x8x64xf32> to vector<8x64xf32>
    %c0_3 = arith.constant 0 : index
    %c0_4 = arith.constant 0 : index
    %12 = vector.load %arg3[%c0_3, %c0_4] : memref<64x32xf32, #tpu.memory_space<vmem>>, vector<64x32xf32>
    %cst_5 = arith.constant dense<0.000000e+00> : vector<8x32xf32>
    %13 = tpu.matmul %11, %12, %cst_5 {dimension_numbers = #tpu.dot_dimension_numbers<[1], [0], [0], [1], [0, 0, 1, 1], [], []>} : vector<8x64xf32>, vector<64x32xf32>, vector<8x32xf32> -> vector<8x32xf32>
    %c0_6 = arith.constant 0 : index
    %c0_7 = arith.constant 0 : index
    %14 = vector.load %arg4[%c0_6, %c0_7] : memref<32x128xf32, #tpu.memory_space<vmem>>, vector<32x128xf32>
    %cst_8 = arith.constant dense<0.000000e+00> : vector<8x128xf32>
    %15 = tpu.matmul %13, %14, %cst_8 {dimension_numbers = #tpu.dot_dimension_numbers<[1], [0], [0], [1], [0, 0, 1, 1], [], []>} : vector<8x32xf32>, vector<32x128xf32>, vector<8x128xf32> -> vector<8x128xf32>
    %c0_9 = arith.constant 0 : index
    %c0_10 = arith.constant 0 : index
    %16 = vector.load %arg5[%c0_9, %c0_10] : memref<1x128xf32, #tpu.memory_space<vmem>>, vector<1x128xf32>
    %17 = vector.broadcast %16 : vector<1x128xf32> to vector<8x128xf32>
    %18 = arith.addf %15, %17 : vector<8x128xf32>
    %c0_11 = arith.constant 0 : index
    %c0_12 = arith.constant 0 : index
    %19 = vector.load %arg9[%c0_11, %c0_12] : memref<8x128xf32, #tpu.memory_space<vmem>>, vector<8x128xf32>
    tpu.vector_store %arg9[%c0_11, %c0_12], %18 {strides = array<i32>} : memref<8x128xf32, #tpu.memory_space<vmem>>, vector<8x128xf32>,
    %c0_13 = arith.constant 0 : index
    %c0_14 = arith.constant 0 : index
    %20 = vector.load %arg6[%c0_13, %c0_14] : memref<8x128xf32, #tpu.memory_space<vmem>>, vector<8x128xf32>
    %c0_15 = arith.constant 0 : index
    %c0_16 = arith.constant 0 : index
    %21 = vector.load %arg7[%c0_15, %c0_16] : memref<1x128xf32, #tpu.memory_space<vmem>>, vector<1x128xf32>
    %cst_17 = arith.constant 1.000000e+00 : f32
    %22 = vector.broadcast %cst_17 : f32 to vector<1x128xf32>
    %23 = arith.subf %21, %22 : vector<1x128xf32>
    %24 = vector.broadcast %23 : vector<1x128xf32> to vector<8x128xf32>
    %25 = arith.mulf %24, %20 : vector<8x128xf32>
    %cst_18 = arith.constant 1.000000e+00 : f32
    %26 = vector.broadcast %cst_18 : f32 to vector<8x128xf32>
    %27 = arith.addf %26, %25 : vector<8x128xf32>
    %28 = math.absf %18 : vector<8x128xf32>
    %cst_19 = arith.constant 0.000000e+00 : f32
    %29 = vector.broadcast %cst_19 : f32 to vector<8x128xf32>
    %30 = arith.subf %29, %28 : vector<8x128xf32>
    %cst_20 = arith.constant 1.000000e+00 : f32
    %31 = vector.broadcast %cst_20 : f32 to vector<8x128xf32>
    %32 = arith.subf %31, %20 : vector<8x128xf32>
    %33 = arith.mulf %32, %18 : vector<8x128xf32>
    %34 = math.exp %30 : vector<8x128xf32>
    %35 = math.log1p %34 : vector<8x128xf32>
    %cst_21 = arith.constant 0.000000e+00 : f32
    %36 = vector.broadcast %cst_21 : f32 to vector<8x128xf32>
    %37 = arith.subf %36, %18 : vector<8x128xf32>
    %cst_22 = arith.constant 0.000000e+00 : f32
    %38 = vector.broadcast %cst_22 : f32 to vector<8x128xf32>
    %39 = arith.maximumf %37, %38 : vector<8x128xf32>
    %40 = arith.addf %35, %39 : vector<8x128xf32>
    %41 = arith.mulf %27, %40 : vector<8x128xf32>
    %42 = arith.addf %33, %41 : vector<8x128xf32>
    %c0_23 = arith.constant 0 : index
    %c0_24 = arith.constant 0 : index
    %43 = vector.load %arg8[%c0_23, %c0_24] : memref<8x128xf32, #tpu.memory_space<vmem>>, vector<8x128xf32>
    %44 = arith.mulf %42, %43 : vector<8x128xf32>
    %cst_25 = arith.constant dense<0.000000e+00> : vector<128xf32>
    %45 = vector.multi_reduction <add>, %44, %cst_25 [0] : vector<8x128xf32> to vector<128xf32>
    %46 = vector.shape_cast %45 : vector<128xf32> to vector<1x128xf32>
    %c0_26 = arith.constant 0 : index
    %c0_27 = arith.constant 0 : index
    %47 = vector.load %arg10[%c0_26, %c0_27] : memref<1x128xf32, #tpu.memory_space<vmem>>, vector<1x128xf32>
    tpu.vector_store %arg10[%c0_26, %c0_27], %46 {strides = array<i32>} : memref<1x128xf32, #tpu.memory_space<vmem>>, vector<1x128xf32>,
    return
  }
  func.func @transform_0(%arg0: i32) -> (i32, i32) {
    %c0_i32 = arith.constant 0 : i32
    %c0_i32_0 = arith.constant 0 : i32
    return %arg0, %c0_i32 : i32, i32
  }
  func.func @transform_1(%arg0: i32) -> (i32, i32) {
    %c0_i32 = arith.constant 0 : i32
    %c0_i32_0 = arith.constant 0 : i32
    return %arg0, %c0_i32 : i32, i32
  }
  func.func @transform_2(%arg0: i32) -> (i32, i32) {
    %c0_i32 = arith.constant 0 : i32
    %c0_i32_0 = arith.constant 0 : i32
    %c0_i32_1 = arith.constant 0 : i32
    return %c0_i32, %c0_i32_0 : i32, i32
  }
  func.func @transform_3(%arg0: i32) -> (i32, i32) {
    %c0_i32 = arith.constant 0 : i32
    %c0_i32_0 = arith.constant 0 : i32
    %c0_i32_1 = arith.constant 0 : i32
    return %c0_i32, %c0_i32_0 : i32, i32
  }
  func.func @transform_4(%arg0: i32) -> (i32, i32) {
    %c0_i32 = arith.constant 0 : i32
    %c0_i32_0 = arith.constant 0 : i32
    %c0_i32_1 = arith.constant 0 : i32
    return %c0_i32, %c0_i32_0 : i32, i32
  }
  func.func @transform_5(%arg0: i32) -> (i32, i32) {
    %c0_i32 = arith.constant 0 : i32
    %c0_i32_0 = arith.constant 0 : i32
    return %arg0, %c0_i32 : i32, i32
  }
  func.func @transform_6(%arg0: i32) -> (i32, i32) {
    %c0_i32 = arith.constant 0 : i32
    %c0_i32_0 = arith.constant 0 : i32
    %c0_i32_1 = arith.constant 0 : i32
    return %c0_i32, %c0_i32_0 : i32, i32
  }
  func.func @transform_7(%arg0: i32) -> (i32, i32) {
    %c0_i32 = arith.constant 0 : i32
    %c0_i32_0 = arith.constant 0 : i32
    return %arg0, %c0_i32 : i32, i32
  }
  func.func @transform_8(%arg0: i32) -> (i32, i32) {
    %c0_i32 = arith.constant 0 : i32
    %c0_i32_0 = arith.constant 0 : i32
    return %arg0, %c0_i32 : i32, i32
  }
  func.func @transform_9(%arg0: i32) -> (i32, i32) {
    %c0_i32 = arith.constant 0 : i32
    %c0_i32_0 = arith.constant 0 : i32
    return %arg0, %c0_i32 : i32, i32
  }
}

</mosaic_0001>

<llo_original>
// kernel: tpu_custom_call.1
$region0: #{tpu_custom_call.1}
  #allocation0 [shape = 'u32[]', space=smem, size = 0x4, offset = 0x4, fixed_abs, tag = 'smem constant byte address 0x4 - core index']
  #allocation1 [shape = 'u32[144,128]{1,0:T(1,128)}', space=vmem, size = 0x12000, scoped, tag = 'internal scratch']
  %s0 = inlined_call_operand.vmem [shape: s32[8,8], index: 0, kind: input, shape index: {}]
  %s1 = inlined_call_operand.vmem [shape: f32[8,8], index: 1, kind: input, shape index: {}]
  %s2 = inlined_call_operand.vmem [shape: f32[64,32], index: 2, kind: input, shape index: {}]
  %s3 = inlined_call_operand.vmem [shape: f32[32,128], index: 3, kind: input, shape index: {}]
  %s4 = inlined_call_operand.vmem [shape: f32[1,128], index: 4, kind: input, shape index: {}]
  %s5 = inlined_call_operand.vmem [shape: f32[8,128], index: 5, kind: input, shape index: {}]
  %s6 = inlined_call_operand.vmem [shape: f32[1,128], index: 6, kind: input, shape index: {}]
  %s7 = inlined_call_operand.vmem [shape: f32[8,128], index: 7, kind: input, shape index: {}]
  %s8 = inlined_call_operand.hbm [shape: f32[8,128], index: 8, kind: output, shape index: {0}]
  %s9 = inlined_call_operand.hbm [shape: f32[1,128], index: 9, kind: output, shape index: {1}]
  %10 = xla_tuple %s8, %s9
  %s11 = sld [smem:[#allocation0]]
  $region50: #{tpu_custom_call.1} parent=0
    _
  %s13 = ssub.s32 1, %s11
  %s14 = scalar_select 0, %s13, %s11
  $region1: #{tpu_custom_call.1} parent=0
    #allocation2 [shape = 'u8[4096]{0}', space=vmem, size = 0x1000, scoped, tag = 'output window, operand 0, single buffered']
    #allocation3 [shape = 's32[1]{0}', space=sflag, size = 0x4, scoped, tag = 'scoped memory for tpu_custom_call.1']
    #allocation4 [shape = 'u8[512]{0}', space=vmem, size = 0x400, scoped, tag = 'output window, operand 1, single buffered']
    #allocation5 [shape = 's32[1]{0}', space=sflag, size = 0x4, scoped, tag = 'scoped memory for tpu_custom_call.1']
    %15 = vsyncpa [#allocation3], 0
    %16 = vsyncpa [#allocation5], 0
    // Predicated region
    $region2: #{tpu_custom_call.1} parent=1 // pred_check
      _
    $region3: #{tpu_custom_call.1} parent=1 // pred_check_branch
      %18 = sbr.rel (0) target = $region5
    $region4: #{tpu_custom_call.1} parent=1 // pred_region
      _
    $region5: #{tpu_custom_call.1} parent=1 // pred_fallthru
      _
    // Predicated region
    $region6: #{tpu_custom_call.1} parent=1 // pred_check
      _
    $region7: #{tpu_custom_call.1} parent=1 // pred_check_branch
      %20 = sbr.rel (0) target = $region9
    $region8: #{tpu_custom_call.1} parent=1 // pred_region
      _
    $region9: #{tpu_custom_call.1} parent=1 // pred_fallthru
      _
    // Predicated region
    $region10: #{tpu_custom_call.1} parent=1 // pred_check
      _
    $region11: #{tpu_custom_call.1} parent=1 // pred_check_branch
      %22 = sbr.rel (0) target = $region13
    $region12: #{tpu_custom_call.1} parent=1 // pred_region
      _
    $region13: #{tpu_custom_call.1} parent=1 // pred_fallthru
      _
    // Predicated region
    $region14: #{tpu_custom_call.1} parent=1 // pred_check
      _
    $region15: #{tpu_custom_call.1} parent=1 // pred_check_branch
      %24 = sbr.rel (0) target = $region17
    $region16: #{tpu_custom_call.1} parent=1 // pred_region
      _
    $region17: #{tpu_custom_call.1} parent=1 // pred_fallthru
      _
    // Predicated region
    $region18: #{tpu_custom_call.1} parent=1 // pred_check
      _
    $region19: #{tpu_custom_call.1} parent=1 // pred_check_branch
      %26 = sbr.rel (0) target = $region21
    $region20: #{tpu_custom_call.1} parent=1 // pred_region
      _
    $region21: #{tpu_custom_call.1} parent=1 // pred_fallthru
      _
    // Predicated region
    $region22: #{tpu_custom_call.1} parent=1 // pred_check
      _
    $region23: #{tpu_custom_call.1} parent=1 // pred_check_branch
      %28 = sbr.rel (0) target = $region25
    $region24: #{tpu_custom_call.1} parent=1 // pred_region
      _
    $region25: #{tpu_custom_call.1} parent=1 // pred_fallthru
      _
    // Predicated region
    $region26: #{tpu_custom_call.1} parent=1 // pred_check
      _
    $region27: #{tpu_custom_call.1} parent=1 // pred_check_branch
      %30 = sbr.rel (0) target = $region29
    $region28: #{tpu_custom_call.1} parent=1 // pred_region
      _
    $region29: #{tpu_custom_call.1} parent=1 // pred_fallthru
      _
    // Predicated region
    $region30: #{tpu_custom_call.1} parent=1 // pred_check
      _
    $region31: #{tpu_custom_call.1} parent=1 // pred_check_branch
      %32 = sbr.rel (0) target = $region33
    $region32: #{tpu_custom_call.1} parent=1 // pred_region
      _
    $region33: #{tpu_custom_call.1} parent=1 // pred_fallthru
      _
    %v33 = vld [vmem:[%s0] sm:$0xff]
    %v34 = vld [vmem:[%s1] sm:$0xff]
    %v35 = vlaneseq
    %v36 = vand.u32 %v35, 127
    %v37 = vlaneseq
    %v38 = vshrl.u32 %v37, 7
    %v39 = vsub.s32 0, %v38
    %v40 = vrot.slane %v33, %v39
    %42 = vbcast.lane.b32.xlu0 %v40, 256
    %v43 = vpop.permute.xlu0 %42
    %v44 = vlaneseq
    %v45 = vshrl.u32 %v44, 7
    %v46 = vsub.s32 1, %v45
    %v47 = vrot.slane %v33, %v46
    %49 = vbcast.lane.b32.xlu0 %v47, 256
    %v50 = vpop.permute.xlu0 %49
    %v51 = vlaneseq
    %v52 = vshrl.u32 %v51, 7
    %v53 = vsub.s32 2, %v52
    %v54 = vrot.slane %v33, %v53
    %56 = vbcast.lane.b32.xlu0 %v54, 256
    %v57 = vpop.permute.xlu0 %56
    %v58 = vlaneseq
    %v59 = vshrl.u32 %v58, 7
    %v60 = vsub.s32 3, %v59
    %v61 = vrot.slane %v33, %v60
    %63 = vbcast.lane.b32.xlu0 %v61, 256
    %v64 = vpop.permute.xlu0 %63
    %v65 = vlaneseq
    %v66 = vshrl.u32 %v65, 7
    %v67 = vsub.s32 4, %v66
    %v68 = vrot.slane %v33, %v67
    %70 = vbcast.lane.b32.xlu0 %v68, 256
    %v71 = vpop.permute.xlu0 %70
    %v72 = vlaneseq
    %v73 = vshrl.u32 %v72, 7
    %v74 = vsub.s32 5, %v73
    %v75 = vrot.slane %v33, %v74
    %77 = vbcast.lane.b32.xlu0 %v75, 256
    %v78 = vpop.permute.xlu0 %77
    %v79 = vlaneseq
    %v80 = vshrl.u32 %v79, 7
    %v81 = vsub.s32 6, %v80
    %v82 = vrot.slane %v33, %v81
    %84 = vbcast.lane.b32.xlu0 %v82, 256
    %v85 = vpop.permute.xlu0 %84
    %v86 = vlaneseq
    %v87 = vshrl.u32 %v86, 7
    %v88 = vsub.s32 7, %v87
    %v89 = vrot.slane %v33, %v88
    %91 = vbcast.lane.b32.xlu0 %v89, 256
    %v92 = vpop.permute.xlu0 %91
    %vm93 = vcmp.eq.s32.totalorder %v43, %v36
    %vm94 = vcmp.eq.s32.totalorder %v50, %v36
    %vm95 = vcmp.eq.s32.totalorder %v57, %v36
    %vm96 = vcmp.eq.s32.totalorder %v64, %v36
    %vm97 = vcmp.eq.s32.totalorder %v71, %v36
    %vm98 = vcmp.eq.s32.totalorder %v78, %v36
    %vm99 = vcmp.eq.s32.totalorder %v85, %v36
    %vm100 = vcmp.eq.s32.totalorder %v92, %v36
    %v101 = vsel %vm93, 1, 0
    %v102 = vsel %vm94, 1, 0
    %v103 = vsel %vm95, 1, 0
    %v104 = vsel %vm96, 1, 0
    %v105 = vsel %vm97, 1, 0
    %v106 = vsel %vm98, 1, 0
    %v107 = vsel %vm99, 1, 0
    %v108 = vsel %vm100, 1, 0
    %v109 = vcvt.s32.f32 %v101
    %v110 = vcvt.s32.f32 %v102
    %v111 = vcvt.s32.f32 %v103
    %v112 = vcvt.s32.f32 %v104
    %v113 = vcvt.s32.f32 %v105
    %v114 = vcvt.s32.f32 %v106
    %v115 = vcvt.s32.f32 %v107
    %v116 = vcvt.s32.f32 %v108
    %v117 = vlaneseq
    %v118 = vshrl.u32 %v117, 7
    %v119 = vsub.s32 0, %v118
    %v120 = vrot.slane %v34, %v119
    %122 = vbcast.lane.b32.xlu0 %v120, 256
    %v123 = vpop.permute.xlu0 %122
    %v124 = vlaneseq
    %v125 = vshrl.u32 %v124, 7
    %v126 = vsub.s32 1, %v125
    %v127 = vrot.slane %v34, %v126
    %129 = vbcast.lane.b32.xlu0 %v127, 256
    %v130 = vpop.permute.xlu0 %129
    %v131 = vlaneseq
    %v132 = vshrl.u32 %v131, 7
    %v133 = vsub.s32 2, %v132
    %v134 = vrot.slane %v34, %v133
    %136 = vbcast.lane.b32.xlu0 %v134, 256
    %v137 = vpop.permute.xlu0 %136
    %v138 = vlaneseq
    %v139 = vshrl.u32 %v138, 7
    %v140 = vsub.s32 3, %v139
    %v141 = vrot.slane %v34, %v140
    %143 = vbcast.lane.b32.xlu0 %v141, 256
    %v144 = vpop.permute.xlu0 %143
    %v145 = vlaneseq
    %v146 = vshrl.u32 %v145, 7
    %v147 = vsub.s32 4, %v146
    %v148 = vrot.slane %v34, %v147
    %150 = vbcast.lane.b32.xlu0 %v148, 256
    %v151 = vpop.permute.xlu0 %150
    %v152 = vlaneseq
    %v153 = vshrl.u32 %v152, 7
    %v154 = vsub.s32 5, %v153
    %v155 = vrot.slane %v34, %v154
    %157 = vbcast.lane.b32.xlu0 %v155, 256
    %v158 = vpop.permute.xlu0 %157
    %v159 = vlaneseq
    %v160 = vshrl.u32 %v159, 7
    %v161 = vsub.s32 6, %v160
    %v162 = vrot.slane %v34, %v161
    %164 = vbcast.lane.b32.xlu0 %v162, 256
    %v165 = vpop.permute.xlu0 %164
    %v166 = vlaneseq
    %v167 = vshrl.u32 %v166, 7
    %v168 = vsub.s32 7, %v167
    %v169 = vrot.slane %v34, %v168
    %171 = vbcast.lane.b32.xlu0 %v169, 256
    %v172 = vpop.permute.xlu0 %171
    %v173 = vmul.f32 %v109, %v123
    %v174 = vmul.f32 %v110, %v130
    %v175 = vmul.f32 %v111, %v137
    %v176 = vmul.f32 %v112, %v144
    %v177 = vmul.f32 %v113, %v151
    %v178 = vmul.f32 %v114, %v158
    %v179 = vmul.f32 %v115, %v165
    %v180 = vmul.f32 %v116, %v172
    %vm181 = vcmask 523264
    %v182 = vsel %vm181, %v173, 0.0
    %v183 = vrot.slane %v182, 4
    %v184 = vadd.f32 %v182, %v183
    %v185 = vrot.slane %v184, 2
    %v186 = vadd.f32 %v184, %v185
    %v187 = vrot.slane %v186, 1
    %v188 = vadd.f32 %v186, %v187
    %v189 = vsel %vm181, %v174, 0.0
    %v190 = vrot.slane %v189, 4
    %v191 = vadd.f32 %v189, %v190
    %v192 = vrot.slane %v191, 2
    %v193 = vadd.f32 %v191, %v192
    %v194 = vrot.slane %v193, 1
    %v195 = vadd.f32 %v193, %v194
    %v196 = vsel %vm181, %v175, 0.0
    %v197 = vrot.slane %v196, 4
    %v198 = vadd.f32 %v196, %v197
    %v199 = vrot.slane %v198, 2
    %v200 = vadd.f32 %v198, %v199
    %v201 = vrot.slane %v200, 1
    %v202 = vadd.f32 %v200, %v201
    %v203 = vsel %vm181, %v176, 0.0
    %v204 = vrot.slane %v203, 4
    %v205 = vadd.f32 %v203, %v204
    %v206 = vrot.slane %v205, 2
    %v207 = vadd.f32 %v205, %v206
    %v208 = vrot.slane %v207, 1
    %v209 = vadd.f32 %v207, %v208
    %v210 = vsel %vm181, %v177, 0.0
    %v211 = vrot.slane %v210, 4
    %v212 = vadd.f32 %v210, %v211
    %v213 = vrot.slane %v212, 2
    %v214 = vadd.f32 %v212, %v213
    %v215 = vrot.slane %v214, 1
    %v216 = vadd.f32 %v214, %v215
    %v217 = vsel %vm181, %v178, 0.0
    %v218 = vrot.slane %v217, 4
    %v219 = vadd.f32 %v217, %v218
    %v220 = vrot.slane %v219, 2
    %v221 = vadd.f32 %v219, %v220
    %v222 = vrot.slane %v221, 1
    %v223 = vadd.f32 %v221, %v222
    %v224 = vsel %vm181, %v179, 0.0
    %v225 = vrot.slane %v224, 4
    %v226 = vadd.f32 %v224, %v225
    %v227 = vrot.slane %v226, 2
    %v228 = vadd.f32 %v226, %v227
    %v229 = vrot.slane %v228, 1
    %v230 = vadd.f32 %v228, %v229
    %v231 = vsel %vm181, %v180, 0.0
    %v232 = vrot.slane %v231, 4
    %v233 = vadd.f32 %v231, %v232
    %v234 = vrot.slane %v233, 2
    %v235 = vadd.f32 %v233, %v234
    %v236 = vrot.slane %v235, 1
    %v237 = vadd.f32 %v235, %v236
    %v238 = vld [vmem:[%s2] sm:$0xff]
    %v239 = vld [vmem:[%s2 + $0x8] sm:$0xff]
    %v240 = vld [vmem:[%s2 + $0x10] sm:$0xff]
    %v241 = vld [vmem:[%s2 + $0x18] sm:$0xff]
    %v242 = vld [vmem:[%s2 + $0x20] sm:$0xff]
    %v243 = vld [vmem:[%s2 + $0x28] sm:$0xff]
    %v244 = vld [vmem:[%s2 + $0x30] sm:$0xff]
    %v245 = vld [vmem:[%s2 + $0x38] sm:$0xff]
    %vm254 = vcmask 1041409
    %v255 = vsel %vm254, %v195, %v188
    %vm256 = vcmask 1042434
    %v257 = vsel %vm256, %v202, %v255
    %vm258 = vcmask 1043459
    %v259 = vsel %vm258, %v209, %v257
    %vm260 = vcmask 1044484
    %v261 = vsel %vm260, %v216, %v259
    %vm262 = vcmask 1045509
    %v263 = vsel %vm262, %v223, %v261
    %vm264 = vcmask 1046534
    %v265 = vsel %vm264, %v230, %v263
    %vm266 = vcmask 1047559
    %v267 = vsel %vm266, %v237, %v265
    %v268 = vsel %vm181, %v267, 0
    %270 = vmatprep.subr.mxu0 0.0
    %271 = vmatpush1.msra.mxu0 0.0
    %272 = vmatprep.subr.mxu0 0.0
    %273 = vmatpush1.msra.mxu0 0.0
    %274 = vmatprep.subr.mxu0 0.0
    %275 = vmatpush1.msra.mxu0 0.0
    %276 = vmatprep.subr.mxu0 0.0
    %277 = vmatpush1.msra.mxu0 0.0
    %278 = vmatprep.subr.mxu0 0.0
    %279 = vmatpush1.msra.mxu0 0.0
    %280 = vmatprep.subr.mxu0 0.0
    %281 = vmatpush1.msra.mxu0 0.0
    %282 = vmatprep.subr.mxu0 0.0
    %283 = vmatpush1.msra.mxu0 0.0
    %284 = vmatprep.subr.mxu0 0.0
    %285 = vmatpush1.msra.mxu0 0.0
    %286 = vmatprep.subr.mxu0 0.0
    %287 = vmatpush1.msra.mxu0 %v245
    %288 = vmatprep.subr.mxu0 0.0
    %289 = vmatpush1.msra.mxu0 %v244
    %290 = vmatprep.subr.mxu0 0.0
    %291 = vmatpush1.msra.mxu0 %v243
    %292 = vmatprep.subr.mxu0 0.0
    %293 = vmatpush1.msra.mxu0 %v242
    %294 = vmatprep.subr.mxu0 0.0
    %295 = vmatpush1.msra.mxu0 %v241
    %296 = vmatprep.subr.mxu0 0.0
    %297 = vmatpush1.msra.mxu0 %v240
    %298 = vmatprep.subr.mxu0 0.0
    %299 = vmatpush1.msra.mxu0 %v239
    %300 = vmatprep.subr.mxu0 0.0
    %301 = vmatpush1.msra.mxu0 %v238
    %302 = vmatprep.subr.mxu0 0.0
    %303 = vmatpush2.msra.mxu0 0.0
    %304 = vmatprep.subr.mxu0 0.0
    %305 = vmatpush2.msra.mxu0 0.0
    %306 = vmatprep.subr.mxu0 0.0
    %307 = vmatpush2.msra.mxu0 0.0
    %308 = vmatprep.subr.mxu0 0.0
    %309 = vmatpush2.msra.mxu0 0.0
    %310 = vmatprep.subr.mxu0 0.0
    %311 = vmatpush2.msra.mxu0 0.0
    %312 = vmatprep.subr.mxu0 0.0
    %313 = vmatpush2.msra.mxu0 0.0
    %314 = vmatprep.subr.mxu0 0.0
    %315 = vmatpush2.msra.mxu0 0.0
    %316 = vmatprep.subr.mxu0 0.0
    %317 = vmatpush2.msra.mxu0 0.0
    %318 = vmatprep.subr.mxu0 0.0
    %319 = vmatpush2.msra.mxu0 0.0
    %320 = vmatprep.subr.mxu0 0.0
    %321 = vmatpush2.msra.mxu0 0.0
    %322 = vmatprep.subr.mxu0 0.0
    %323 = vmatpush2.msra.mxu0 0.0
    %324 = vmatprep.subr.mxu0 0.0
    %325 = vmatpush2.msra.mxu0 0.0
    %326 = vmatprep.subr.mxu0 0.0
    %327 = vmatpush2.msra.mxu0 0.0
    %328 = vmatprep.subr.mxu0 0.0
    %329 = vmatpush2.msra.mxu0 0.0
    %330 = vmatprep.subr.mxu0 0.0
    %331 = vmatpush2.msra.mxu0 0.0
    %332 = vmatprep.subr.mxu0 0.0
    %333 = vmatpush2.msra.mxu0 0.0
    %334 = vmatprep.mubr.f32.mxu0 0.0
    %335 = vmatmul.mubr.f32.gmra.mxu0 %v268
    %v336 = vpop.f32.mrf.mxu0
    %v337 = vadd.f32 0.0, %v336
    %v338 = vpop.f32.mrf.mxu0
    %339 = vdwg.mxu0
    %v340 = vld [vmem:[%s3] sm:$0xff]
    %v341 = vld [vmem:[%s3 + $0x8] sm:$0xff]
    %v342 = vld [vmem:[%s3 + $0x10] sm:$0xff]
    %v343 = vld [vmem:[%s3 + $0x18] sm:$0xff]
    %v344 = vld [vmem:[%s4] sm:$0x1]
    %v346 = vlaneseq
    %v347 = vshrl.u32 %v346, 7
    %v348 = vsub.s32 0, %v347
    %v349 = vrot.slane %v344, %v348
    %vm351 = vcmask 261120
    %v353 = vsel %vm351, %v337, 0
    %355 = vmatprep.subr.mxu0 0.0
    %356 = vmatpush1.msra.mxu0 0.0
    %357 = vmatprep.subr.mxu0 0.0
    %358 = vmatpush1.msra.mxu0 0.0
    %359 = vmatprep.subr.mxu0 0.0
    %360 = vmatpush1.msra.mxu0 0.0
    %361 = vmatprep.subr.mxu0 0.0
    %362 = vmatpush1.msra.mxu0 0.0
    %363 = vmatprep.subr.mxu0 0.0
    %364 = vmatpush1.msra.mxu0 0.0
    %365 = vmatprep.subr.mxu0 0.0
    %366 = vmatpush1.msra.mxu0 0.0
    %367 = vmatprep.subr.mxu0 0.0
    %368 = vmatpush1.msra.mxu0 0.0
    %369 = vmatprep.subr.mxu0 0.0
    %370 = vmatpush1.msra.mxu0 0.0
    %371 = vmatprep.subr.mxu0 0.0
    %372 = vmatpush1.msra.mxu0 0.0
    %373 = vmatprep.subr.mxu0 0.0
    %374 = vmatpush1.msra.mxu0 0.0
    %375 = vmatprep.subr.mxu0 0.0
    %376 = vmatpush1.msra.mxu0 0.0
    %377 = vmatprep.subr.mxu0 0.0
    %378 = vmatpush1.msra.mxu0 0.0
    %379 = vmatprep.subr.mxu0 0.0
    %380 = vmatpush1.msra.mxu0 %v343
    %381 = vmatprep.subr.mxu0 0.0
    %382 = vmatpush1.msra.mxu0 %v342
    %383 = vmatprep.subr.mxu0 0.0
    %384 = vmatpush1.msra.mxu0 %v341
    %385 = vmatprep.subr.mxu0 0.0
    %386 = vmatpush1.msra.mxu0 %v340
    %387 = vmatprep.subr.mxu0 0.0
    %388 = vmatpush2.msra.mxu0 0.0
    %389 = vmatprep.subr.mxu0 0.0
    %390 = vmatpush2.msra.mxu0 0.0
    %391 = vmatprep.subr.mxu0 0.0
    %392 = vmatpush2.msra.mxu0 0.0
    %393 = vmatprep.subr.mxu0 0.0
    %394 = vmatpush2.msra.mxu0 0.0
    %395 = vmatprep.subr.mxu0 0.0
    %396 = vmatpush2.msra.mxu0 0.0
    %397 = vmatprep.subr.mxu0 0.0
    %398 = vmatpush2.msra.mxu0 0.0
    %399 = vmatprep.subr.mxu0 0.0
    %400 = vmatpush2.msra.mxu0 0.0
    %401 = vmatprep.subr.mxu0 0.0
    %402 = vmatpush2.msra.mxu0 0.0
    %403 = vmatprep.subr.mxu0 0.0
    %404 = vmatpush2.msra.mxu0 0.0
    %405 = vmatprep.subr.mxu0 0.0
    %406 = vmatpush2.msra.mxu0 0.0
    %407 = vmatprep.subr.mxu0 0.0
    %408 = vmatpush2.msra.mxu0 0.0
    %409 = vmatprep.subr.mxu0 0.0
    %410 = vmatpush2.msra.mxu0 0.0
    %411 = vmatprep.subr.mxu0 0.0
    %412 = vmatpush2.msra.mxu0 0.0
    %413 = vmatprep.subr.mxu0 0.0
    %414 = vmatpush2.msra.mxu0 0.0
    %415 = vmatprep.subr.mxu0 0.0
    %416 = vmatpush2.msra.mxu0 0.0
    %417 = vmatprep.subr.mxu0 0.0
    %418 = vmatpush2.msra.mxu0 0.0
    %419 = vmatprep.mubr.f32.mxu0 0.0
    %420 = vmatmul.mubr.f32.gmra.mxu0 %v353
    %v421 = vpop.f32.mrf.mxu0
    %v422 = vadd.f32 %v349, %v421
    %v423 = vpop.f32.mrf.mxu0
    %424 = vdwg.mxu0
    %425 = vst [vmem:[#allocation2] sm:$0xff] %v422
    %v426 = vld [vmem:[%s5] sm:$0xff]
    %v427 = vld [vmem:[%s6] sm:$0x1]
    %v428 = vsub.f32 %v427, 1.0
    %v430 = vlaneseq
    %v431 = vshrl.u32 %v430, 7
    %v432 = vsub.s32 0, %v431
    %v433 = vrot.slane %v428, %v432
    %v435 = vmul.f32 %v433, %v426
    %v436 = vadd.f32 %v435, 1.0
    %v437 = vand.u32 2147483647, %v422
    %v438 = vsub.f32 0.0, %v437
    %v439 = vsub.f32 1.0, %v426
    %v440 = vmul.f32 %v439, %v422
    %v441 = vmul.f32 %v438, 1.442695
    %v442 = vpow.pop %v441
    %v443 = vadd.f32 %v442, 1.0
    %v444 = vlog2.pop %v443
    %v445 = vmul.f32 %v444, 0.6931472
    %v446 = vmul.f32 -0.5, %v442
    %v447 = vadd.f32 %v446, 1.0
    %v448 = vmul.f32 %v447, %v442
    %v449 = vand.u32 2147483647, %v442
    %vm450 = vcmp.lt.f32.partialorder %v449, 0.0004427343
    %v451 = vsel %vm450, %v448, %v445
    %v452 = vsub.f32 0.0, %v422
    %v453 = vmax.f32 %v452, 0.0
    %v454 = vadd.f32 %v451, %v453
    %v455 = vmul.f32 %v436, %v454
    %v456 = vadd.f32 %v440, %v455
    %v457 = vld [vmem:[%s7] sm:$0xff]
    %v458 = vmul.f32 %v456, %v457
    %v459 = vrot.slane %v458, 4
    %v460 = vadd.f32 %v458, %v459
    %v461 = vrot.slane %v460, 2
    %v462 = vadd.f32 %v460, %v461
    %v463 = vrot.slane %v462, 1
    %v464 = vadd.f32 %v462, %v463
    %465 = vst [vmem:[#allocation4] sm:$0x1] %v464
    // Predicated region
    $region34: #{tpu_custom_call.1} parent=1 // pred_check
      _
    $region35: #{tpu_custom_call.1} parent=1 // pred_check_branch
      %467 = sbr.rel (0) target = $region37
    $region36: #{tpu_custom_call.1} parent=1 // pred_region
      %s469 = ssub.s32 128, 128
      %470 = vsyncadd [#allocation3], %s469
      %s472 = sshll.u32 [#allocation2], 4
      %s473 = int_to_ptr.vmem [resolvable:$true] %s472
      %475 = dma.vmem_to_hbm [thread:$0]  %s473, 128, %s8, [#allocation3]
    $region37: #{tpu_custom_call.1} parent=1 // pred_fallthru
      _
    // Predicated region
    $region38: #{tpu_custom_call.1} parent=1 // pred_check
      _
    $region39: #{tpu_custom_call.1} parent=1 // pred_check_branch
      %477 = sbr.rel (0) target = $region41
    $region40: #{tpu_custom_call.1} parent=1 // pred_region
      %s479 = ssub.s32 16, 16
      %480 = vsyncadd [#allocation5], %s479
      %s482 = sshll.u32 [#allocation4], 4
      %s483 = int_to_ptr.vmem [resolvable:$true] %s482
      %485 = dma.vmem_to_hbm [thread:$0]  %s483, 16, %s9, [#allocation5]
    $region41: #{tpu_custom_call.1} parent=1 // pred_fallthru
      _
    // Predicated region
    $region42: #{tpu_custom_call.1} parent=1 // pred_check
      _
    $region43: #{tpu_custom_call.1} parent=1 // pred_check_branch
      %487 = sbr.rel (0) target = $region45
    $region44: #{tpu_custom_call.1} parent=1 // pred_region
      %488 = dma.done [#allocation3], 128
    $region45: #{tpu_custom_call.1} parent=1 // pred_fallthru
      _
    // Predicated region
    $region46: #{tpu_custom_call.1} parent=1 // pred_check
      _
    $region47: #{tpu_custom_call.1} parent=1 // pred_check_branch
      %490 = sbr.rel (0) target = $region49
    $region48: #{tpu_custom_call.1} parent=1 // pred_region
      %491 = dma.done [#allocation5], 16
    $region49: #{tpu_custom_call.1} parent=1 // pred_fallthru
      _
    %492 = vsyncpa [#allocation3], 1
    %493 = vsyncpa [#allocation5], 1

</llo_original>
